<compile_context>
chip_gen: v6e
topology: v6e:2x2x1
jax: 0.10.0
libtpu: 0.0.40
codegen_flags: <defaults>
</compile_context>

<pallas_src>
import math

import jax
import jax.numpy as jnp
from jax.experimental import pallas as pl
from jax.experimental.pallas import tpu as pltpu


def _sqerr_kernel(p_ref, t_ref, out_ref):
    """Accumulate per-row sum((pred - target)^2) into a resident (bt, 1) block."""
    j = pl.program_id(1)

    @pl.when(j == 0)
    def _():
        out_ref[...] = jnp.zeros_like(out_ref)

    d = p_ref[...].astype(jnp.float32) - t_ref[...].astype(jnp.float32)
    out_ref[...] += jnp.sum(d * d, axis=1, keepdims=True)


def _choose_b_tile(b):
    # Several images per grid step; tile must divide b (and be 8-aligned or full).
    for bt in (32, 16, 8):
        if b % bt == 0:
            return bt
    return b  # full batch as one block (always a legal block shape)


def _choose_n_tile(n, bt):
    # Cap each input block at bt * nt <= 512K f32 elements (2 MiB / block).
    # With 2 inputs x 2 pipeline buffers that is <= 8 MiB of VMEM, safe even on
    # v5e's 16 MiB scoped-VMEM default, while keeping tiles wide enough to be
    # near the HBM roofline.
    cap = (512 * 1024) // max(bt, 1)
    if n <= cap:
        return n
    t = (cap // 128) * 128
    while t >= 128:
        if n % t == 0:
            return t
        t -= 128
    return n  # no 128-aligned divisor; fall back to one full-row block


def psnr_loss(pred, target, loss_weight=1.0, toY=False, eps=1e-8):
    assert pred.ndim == 4 and target.shape == pred.shape
    scale = 10.0 / math.log(10.0)

    if toY:
        # Tiny per-pixel channel-weighted sum (c=3); done in plain JAX wrapper.
        coef = jnp.array([65.481, 128.553, 24.966], jnp.float32).reshape(1, 3, 1, 1)
        pred = jnp.sum(pred * coef, axis=1, keepdims=True) + 16.0
        target = jnp.sum(target * coef, axis=1, keepdims=True) + 16.0
        pred, target = pred / 255.0, target / 255.0

    b, c, h, w = pred.shape
    n = c * h * w

    # Lane-dense flattening: last dim n = c*h*w (multiple of 128 for typical images).
    p2 = pred.reshape(b, n)
    t2 = target.reshape(b, n)

    bt = _choose_b_tile(b)
    nt = _choose_n_tile(n, bt)
    grid = (b // bt, n // nt)

    sums = pl.pallas_call(
        _sqerr_kernel,
        out_shape=jax.ShapeDtypeStruct((b, 1), jnp.float32),
        grid=grid,
        in_specs=[
            pl.BlockSpec((bt, nt), lambda i, j: (i, j)),
            pl.BlockSpec((bt, nt), lambda i, j: (i, j)),
        ],
        out_specs=pl.BlockSpec((bt, 1), lambda i, j: (i, 0)),
        compiler_params=pltpu.CompilerParams(
            dimension_semantics=("parallel", "arbitrary"),
        ),
    )(p2, t2)

    # Final tiny reduction on the (b,) per-image sums.
    mse = sums[:, 0] * (1.0 / n)
    return loss_weight * scale * jnp.mean(jnp.log(mse + eps))


def psnr_loss_ref(pred, target, loss_weight=1.0, toY=False, eps=1e-8):
    scale = 10.0 / math.log(10.0)
    if toY:
        coef = jnp.array([65.481, 128.553, 24.966], jnp.float32).reshape(1, 3, 1, 1)
        pred = jnp.sum(pred * coef, axis=1, keepdims=True) + 16.0
        target = jnp.sum(target * coef, axis=1, keepdims=True) + 16.0
        pred, target = pred / 255.0, target / 255.0
    mse = jnp.mean((pred - target) ** 2, axis=(1, 2, 3))
    return loss_weight * scale * jnp.mean(jnp.log(mse + eps))


if __name__ == "__main__":
    key = jax.random.PRNGKey(0)
    b, c, h, w = 2, 4, 16, 16
    k1, k2, k3, k4 = jax.random.split(key, 4)

    pred = jax.random.uniform(k1, (b, c, h, w), dtype=jnp.float32)
    target = jax.random.uniform(k2, (b, c, h, w), dtype=jnp.float32)

    out = jax.block_until_ready(psnr_loss(pred, target))
    ref = psnr_loss_ref(pred, target)
    assert jnp.allclose(out, ref, rtol=1e-5, atol=1e-6), (out, ref)

    # toY=True path (requires 3 channels).
    pred3 = jax.random.uniform(k3, (b, 3, h, w), dtype=jnp.float32)
    target3 = jax.random.uniform(k4, (b, 3, h, w), dtype=jnp.float32)
    out_y = jax.block_until_ready(psnr_loss(pred3, target3, toY=True))
    ref_y = psnr_loss_ref(pred3, target3, toY=True)
    assert jnp.allclose(out_y, ref_y, rtol=1e-5, atol=1e-6), (out_y, ref_y)

    print("KERNEL_OK")
</pallas_src>

<mosaic_0001>
module attributes {stable_mosaic.version = 11 : i64} {
  func.func @_sqerr_kernel(%arg0: i32, %arg1: i32, %arg2: memref<2x1024xf32, #tpu.memory_space<vmem>>, %arg3: memref<2x1024xf32, #tpu.memory_space<vmem>>, %arg4: memref<2x1xf32, #tpu.memory_space<vmem>>) attributes {dimension_semantics = [#tpu.dimension_semantics<parallel>, #tpu.dimension_semantics<arbitrary>], iteration_bounds = array<i64: 1, 1>, scalar_prefetch = 0 : i64, scratch_operands = 0 : i64, tpu.core_type = #tpu.core_type<tc>, window_params = [{transform_indices = @transform_0, window_bounds = array<i64: 2, 1024>}, {transform_indices = @transform_1, window_bounds = array<i64: 2, 1024>}, {transform_indices = @transform_2, window_bounds = array<i64: 2, 1>}]} {
    %c0_i32 = arith.constant 0 : i32
    %0 = arith.cmpi eq, %arg1, %c0_i32 : i32
    %1 = arith.extui %0 : i1 to i32
    %c0_i32_0 = arith.constant 0 : i32
    %2 = arith.cmpi ne, %1, %c0_i32_0 : i32
    scf.if %2 {
      %cst_8 = arith.constant 0.000000e+00 : f32
      %12 = vector.broadcast %cst_8 : f32 to vector<2x1xf32>
      %c0_9 = arith.constant 0 : index
      %c0_10 = arith.constant 0 : index
      %13 = vector.load %arg4[%c0_9, %c0_10] : memref<2x1xf32, #tpu.memory_space<vmem>>, vector<2x1xf32>
      tpu.vector_store %arg4[%c0_9, %c0_10], %12 {strides = array<i32>} : memref<2x1xf32, #tpu.memory_space<vmem>>, vector<2x1xf32>,
    } else {
    }
    %c0 = arith.constant 0 : index
    %c0_1 = arith.constant 0 : index
    %3 = vector.load %arg2[%c0, %c0_1] : memref<2x1024xf32, #tpu.memory_space<vmem>>, vector<2x1024xf32>
    %c0_2 = arith.constant 0 : index
    %c0_3 = arith.constant 0 : index
    %4 = vector.load %arg3[%c0_2, %c0_3] : memref<2x1024xf32, #tpu.memory_space<vmem>>, vector<2x1024xf32>
    %5 = arith.subf %3, %4 : vector<2x1024xf32>
    %c0_4 = arith.constant 0 : index
    %c0_5 = arith.constant 0 : index
    %6 = vector.load %arg4[%c0_4, %c0_5] : memref<2x1xf32, #tpu.memory_space<vmem>>, vector<2x1xf32>
    %7 = arith.mulf %5, %5 : vector<2x1024xf32>
    %cst = arith.constant dense<0.000000e+00> : vector<2xf32>
    %8 = vector.multi_reduction <add>, %7, %cst [1] : vector<2x1024xf32> to vector<2xf32>
    %9 = vector.shape_cast %8 : vector<2xf32> to vector<2x1xf32>
    %10 = arith.addf %6, %9 : vector<2x1xf32>
    %c0_6 = arith.constant 0 : index
    %c0_7 = arith.constant 0 : index
    %11 = vector.load %arg4[%c0_6, %c0_7] : memref<2x1xf32, #tpu.memory_space<vmem>>, vector<2x1xf32>
    tpu.vector_store %arg4[%c0_6, %c0_7], %10 {strides = array<i32>} : memref<2x1xf32, #tpu.memory_space<vmem>>, vector<2x1xf32>,
    return
  }
  func.func @transform_0(%arg0: i32, %arg1: i32) -> (i32, i32) {
    %c0_i32 = arith.constant 0 : i32
    return %arg0, %arg1 : i32, i32
  }
  func.func @transform_1(%arg0: i32, %arg1: i32) -> (i32, i32) {
    %c0_i32 = arith.constant 0 : i32
    return %arg0, %arg1 : i32, i32
  }
  func.func @transform_2(%arg0: i32, %arg1: i32) -> (i32, i32) {
    %c0_i32 = arith.constant 0 : i32
    %c0_i32_0 = arith.constant 0 : i32
    return %arg0, %c0_i32 : i32, i32
  }
}

</mosaic_0001>

<llo_original>
// kernel: tpu_custom_call.1
$region0: #{tpu_custom_call.1}
  #allocation0 [shape = 'u32[]', space=smem, size = 0x4, offset = 0x4, fixed_abs, tag = 'smem constant byte address 0x4 - core index']
  #allocation1 [shape = 'u32[144,128]{1,0:T(1,128)}', space=vmem, size = 0x12000, scoped, tag = 'internal scratch']
  %s0 = inlined_call_operand.hbm [shape: f32[2,1024], index: 0, kind: input, shape index: {}]
  %s1 = inlined_call_operand.hbm [shape: f32[2,1024], index: 1, kind: input, shape index: {}]
  %s2 = inlined_call_operand.vmem [shape: f32[2,1], index: 2, kind: output, shape index: {}]
  %s3 = sld [smem:[#allocation0]]
  $region30: #{tpu_custom_call.1} parent=0
    _
  %s5 = ssub.s32 1, %s3
  %s6 = scalar_select 0, %s5, %s3
  $region1: #{tpu_custom_call.1} parent=0
    #allocation2 [shape = 'u8[8192]{0}', space=vmem, size = 0x2000, scoped, tag = 'input window, operand 0, single buffered']
    #allocation3 [shape = 's32[1]{0}', space=sflag, size = 0x4, scoped, tag = 'scoped memory for tpu_custom_call.1']
    #allocation4 [shape = 'u8[8192]{0}', space=vmem, size = 0x2000, scoped, tag = 'input window, operand 1, single buffered']
    #allocation5 [shape = 's32[1]{0}', space=sflag, size = 0x4, scoped, tag = 'scoped memory for tpu_custom_call.1']
    %7 = vsyncpa [#allocation3], 0
    %8 = vsyncpa [#allocation5], 0
    // Predicated region
    $region2: #{tpu_custom_call.1} parent=1 // pred_check
      _
    $region3: #{tpu_custom_call.1} parent=1 // pred_check_branch
      %10 = sbr.rel (0) target = $region5
    $region4: #{tpu_custom_call.1} parent=1 // pred_region
      %s12 = ssub.s32 256, 256
      %13 = vsyncadd [#allocation3], %s12
      %s15 = sshll.u32 [#allocation2], 4
      %s16 = int_to_ptr.vmem [resolvable:$true] %s15
      %18 = dma.hbm_to_vmem [thread:$0]  %s0, 256, %s16, [#allocation3]
    $region5: #{tpu_custom_call.1} parent=1 // pred_fallthru
      _
    // Predicated region
    $region6: #{tpu_custom_call.1} parent=1 // pred_check
      _
    $region7: #{tpu_custom_call.1} parent=1 // pred_check_branch
      %20 = sbr.rel (0) target = $region9
    $region8: #{tpu_custom_call.1} parent=1 // pred_region
      %s22 = ssub.s32 256, 256
      %23 = vsyncadd [#allocation5], %s22
      %s25 = sshll.u32 [#allocation4], 4
      %s26 = int_to_ptr.vmem [resolvable:$true] %s25
      %28 = dma.hbm_to_vmem [thread:$0]  %s1, 256, %s26, [#allocation5]
    $region9: #{tpu_custom_call.1} parent=1 // pred_fallthru
      _
    // Predicated region
    $region10: #{tpu_custom_call.1} parent=1 // pred_check
      _
    $region11: #{tpu_custom_call.1} parent=1 // pred_check_branch
      %30 = sbr.rel (0) target = $region13
    $region12: #{tpu_custom_call.1} parent=1 // pred_region
      %31 = dma.done [#allocation3], 256
    $region13: #{tpu_custom_call.1} parent=1 // pred_fallthru
      _
    // Predicated region
    $region14: #{tpu_custom_call.1} parent=1 // pred_check
      _
    $region15: #{tpu_custom_call.1} parent=1 // pred_check_branch
      %33 = sbr.rel (0) target = $region17
    $region16: #{tpu_custom_call.1} parent=1 // pred_region
      %34 = dma.done [#allocation5], 256
    $region17: #{tpu_custom_call.1} parent=1 // pred_fallthru
      _
    %p35 = scmp.eq.s32.totalorder 0, 0
    // Predicated region
    $region18: #{tpu_custom_call.1} parent=1 // pred_check
      %p36 = pneg %p35
    $region19: #{tpu_custom_call.1} parent=1 // pred_check_branch
      %38 = sbr.rel (%p36) target = $region21
    $region20: #{tpu_custom_call.1} parent=1 // pred_region
      %vm39 = vcmask 1024
      %40 = vst.msk [vmem:[%s2] sm:$0x3] %vm39, 0.0
    $region21: #{tpu_custom_call.1} parent=1 // pred_fallthru
      _
    %v41 = vld [vmem:[#allocation2] sm:$0xff]
    %v42 = vld [vmem:[#allocation2 + $0x8] sm:$0xff]
    %v43 = vld [vmem:[#allocation4] sm:$0xff]
    %v44 = vld [vmem:[#allocation4 + $0x8] sm:$0xff]
    %v45 = vsub.f32 %v41, %v43
    %v46 = vsub.f32 %v42, %v44
    %v47 = vld [vmem:[%s2] sm:$0x3]
    %v48 = vmul.f32 %v45, %v45
    %v49 = vmul.f32 %v46, %v46
    %v52 = vcombine.high %v48, %v48
    %v54 = vunpack.c.l.s4 1983009808
    %v55 = vunpack.c.0.s8 %v54
    %v56 = vlaneseq
    %v57 = vshrl.u32 %v56, 7
    %v58 = vsub.s32 %v55, %v57
    %v59 = vrot.slane %v48, %v58
    %v61 = vunpack.c.l.s4 1983009808
    %v62 = vunpack.c.0.s8 %v61
    %v63 = vlaneseq
    %v64 = vshrl.u32 %v63, 7
    %v65 = vsub.s32 %v62, %v64
    %v66 = vrot.slane %v52, %v65
    %v67 = vcombine.high %v59, %v59
    %v68 = vcombine.high %v66, %v66
    %v69 = vcombine.high %v49, %v49
    %v71 = vunpack.c.l.s4 1983009808
    %v72 = vunpack.c.0.s8 %v71
    %v73 = vlaneseq
    %v74 = vshrl.u32 %v73, 7
    %v75 = vsub.s32 %v72, %v74
    %v76 = vrot.slane %v49, %v75
    %v78 = vunpack.c.l.s4 1983009808
    %v79 = vunpack.c.0.s8 %v78
    %v80 = vlaneseq
    %v81 = vshrl.u32 %v80, 7
    %v82 = vsub.s32 %v79, %v81
    %v83 = vrot.slane %v69, %v82
    %v84 = vcombine.high %v76, %v76
    %v85 = vcombine.high %v83, %v83
    %vm94 = vcmask 1041408
    %v95 = vsel %vm94, %v59, 0.0
    %v96 = vsel %vm94, %v67, 0.0
    %v97 = vadd.f32 %v95, %v96
    %v98 = vsel %vm94, %v66, 0.0
    %v99 = vadd.f32 %v97, %v98
    %v100 = vsel %vm94, %v68, 0.0
    %v101 = vadd.f32 %v99, %v100
    %v102 = vsel %vm94, %v76, 0.0
    %v103 = vadd.f32 %v101, %v102
    %v104 = vsel %vm94, %v84, 0.0
    %v105 = vadd.f32 %v103, %v104
    %v106 = vsel %vm94, %v83, 0.0
    %v107 = vadd.f32 %v105, %v106
    %v108 = vsel %vm94, %v85, 0.0
    %v109 = vadd.f32 %v107, %v108
    %110 = vadd.xlane.f32.xlu0 %v109
    %v111 = vpop.xlane.xlu0 %110
    %v112 = vadd.f32 %v47, %v111
    %vm113 = vcmask 1024
    %114 = vst.msk [vmem:[%s2] sm:$0x3] %vm113, %v112
    // Predicated region
    $region22: #{tpu_custom_call.1} parent=1 // pred_check
      _
    $region23: #{tpu_custom_call.1} parent=1 // pred_check_branch
      %116 = sbr.rel (0) target = $region25
    $region24: #{tpu_custom_call.1} parent=1 // pred_region
      _
    $region25: #{tpu_custom_call.1} parent=1 // pred_fallthru
      _
    // Predicated region
    $region26: #{tpu_custom_call.1} parent=1 // pred_check
      _
    $region27: #{tpu_custom_call.1} parent=1 // pred_check_branch
      %118 = sbr.rel (0) target = $region29
    $region28: #{tpu_custom_call.1} parent=1 // pred_region
      _
    $region29: #{tpu_custom_call.1} parent=1 // pred_fallthru
      _
    %119 = vsyncpa [#allocation3], 1
    %120 = vsyncpa [#allocation5], 1

</llo_original>
